<compile_context>
chip_gen: v7x
topology: tpu7x:2x2x1
jax: 0.10.0
libtpu: 0.0.40
codegen_flags: <defaults>
</compile_context>

<pallas_src>
import functools

import jax
import jax.numpy as jnp
from jax import lax
from jax.experimental import pallas as pl
from jax.experimental.pallas import tpu as pltpu


def _reward_kernel(x_ref, w1t_ref, b1_ref, w2t_ref, b2_ref, w3c_ref, b3_ref,
                   out_ref):
    x = x_ref[...]                                     # (TB, in) op dtype

    # affine1 + ReLU:  h1^T = W1^T @ x^T, contracting x's last dim directly
    # (no materialized transpose; f32 accumulate on the MXU).
    h1 = lax.dot_general(w1t_ref[...], x,
                         dimension_numbers=(((1,), (1,)), ((), ())),
                         preferred_element_type=jnp.float32)      # (H, TB)
    h1 = jnp.maximum(h1 + b1_ref[...], 0.0)

    # affine2 + ReLU (f32 accumulate, f32 elementwise — v5e-safe).
    h2 = jnp.dot(w2t_ref[...], h1.astype(w2t_ref.dtype),
                 preferred_element_type=jnp.float32)              # (H, TB)
    h2 = jnp.maximum(h2 + b2_ref[...], 0.0)

    # reward_head: (1,H)x(H,TB) done as VPU multiply + sublane reduction
    # (skips a nearly-empty M=1 MXU round trip).
    logits = jnp.sum(h2 * w3c_ref[...], axis=0, keepdims=True) + b3_ref[...]

    # sigmoid = 1 / (1 + exp(-x)); exp + approx reciprocal both land on the EUP.
    out_ref[...] = pl.reciprocal(1.0 + jnp.exp(-logits),
                                 approx=True).astype(out_ref.dtype)   # (1, TB)


@functools.partial(jax.jit, static_argnames=("block_b", "compute_dtype"))
def reward_forward(x, w1, b1, w2, b2, w3, b3, *,
                   block_b=8192, compute_dtype=jnp.bfloat16):
    """Fused Reward MLP forward.

    x:  (batch, input_size) float32
    w*: (in_features, out_features), b*: (out_features,)
    compute_dtype: dtype for MXU operands (default bf16); accumulation and all
                   elementwise math (bias/ReLU/sigmoid) stay in float32.
    Returns (batch, 1) float32, matching the PyTorch module.
    """
    batch, in_size = x.shape
    hidden = w1.shape[1]
    op_dtype = jnp.dtype(compute_dtype)

    # ---- batch tiling (128-aligned); keep >=2 grid steps when possible ------
    padded = max(128, ((batch + 127) // 128) * 128)
    tb = max(128, (min(int(block_b), padded) // 128) * 128)
    if padded // tb < 2 and padded >= 256:
        tb = max(128, ((padded // 2) // 128) * 128)
    padded = ((padded + tb - 1) // tb) * tb
    grid = (padded // tb,)

    # x stays (batch, in); only a fused cast (+pad when needed) pass in XLA.
    x_op = x.astype(op_dtype)
    if padded != batch:
        x_op = jnp.pad(x_op, ((0, padded - batch), (0, 0)))

    # Weight-stationary transposed weights; biases / head column in f32.
    w1t = w1.T.astype(op_dtype)                       # (H, in)
    w2t = w2.T.astype(op_dtype)                       # (H, H)
    w3c = w3.astype(jnp.float32).reshape(hidden, 1)   # (H, 1) head column
    b1c = b1.reshape(hidden, 1).astype(jnp.float32)
    b2c = b2.reshape(hidden, 1).astype(jnp.float32)
    b3c = b3.reshape(1, 1).astype(jnp.float32)

    const = lambda a: pl.BlockSpec(a.shape, lambda i: (0,) * a.ndim)

    itemsize = jnp.dtype(op_dtype).itemsize
    cost = pl.CostEstimate(
        flops=2 * padded * (in_size * hidden + hidden * hidden + hidden),
        transcendentals=2 * padded,  # exp + approx reciprocal
        bytes_accessed=(x_op.size * itemsize
                        + (w1t.size + w2t.size) * itemsize
                        + (w3c.size + b1c.size + b2c.size + b3c.size) * 4
                        + padded * 4),
    )

    out_t = pl.pallas_call(
        _reward_kernel,
        out_shape=jax.ShapeDtypeStruct((1, padded), jnp.float32),
        grid_spec=pltpu.PrefetchScalarGridSpec(
            num_scalar_prefetch=0,
            grid=grid,
            in_specs=[
                pl.BlockSpec((tb, in_size), lambda i: (i, 0)),   # x tile
                const(w1t), const(b1c),                          # VMEM-resident
                const(w2t), const(b2c),
                const(w3c), const(b3c),
            ],
            out_specs=pl.BlockSpec((1, tb), lambda i: (0, i)),   # lane-dense out
        ),
        compiler_params=pltpu.CompilerParams(
            dimension_semantics=("parallel",)),
        cost_estimate=cost,
    )(x_op, w1t, b1c, w2t, b2c, w3c, b3c)

    # De-pad inside the same jit; (1, padded) -> (batch, 1) is a cheap
    # slice + reshape fused into this program.
    return out_t[0, :batch].reshape(batch, 1)


def init_params(key, state_size, action_size, latent_size, hidden_size):
    """PyTorch-like uniform(+/- 1/sqrt(fan_in)) init. Weights are (in, out)."""
    input_size = state_size + action_size + latent_size
    keys = jax.random.split(key, 6)

    def linear(kw, kb, fan_in, fan_out):
        bound = 1.0 / jnp.sqrt(fan_in)
        w = jax.random.uniform(kw, (fan_in, fan_out), jnp.float32, -bound, bound)
        b = jax.random.uniform(kb, (fan_out,), jnp.float32, -bound, bound)
        return w, b

    w1, b1 = linear(keys[0], keys[1], input_size, hidden_size)
    w2, b2 = linear(keys[2], keys[3], hidden_size, hidden_size)
    w3, b3 = linear(keys[4], keys[5], hidden_size, 1)
    return w1, b1, w2, b2, w3, b3


def _reference(x, w1, b1, w2, b2, w3, b3):
    h1 = jnp.maximum(x @ w1 + b1, 0.0)
    h2 = jnp.maximum(h1 @ w2 + b2, 0.0)
    return jax.nn.sigmoid(h2 @ w3 + b3.reshape(1, 1))


if __name__ == "__main__":
    # Shapes consistent with the module: state=4, action=2, latent=2 -> in=8,
    # hidden=32; small batch=8 for the primary correctness check.
    state_size, action_size, latent_size, hidden_size = 4, 2, 2, 32
    input_size = state_size + action_size + latent_size

    key = jax.random.PRNGKey(0)
    kx, kx2, kp = jax.random.split(key, 3)
    params = init_params(kp, state_size, action_size, latent_size, hidden_size)

    # 1) small batch, f32 operands, single tile
    x = jax.random.normal(kx, (8, input_size), jnp.float32)
    out = jax.block_until_ready(
        reward_forward(x, *params, compute_dtype=jnp.float32))
    ref = _reference(x, *params)
    assert out.shape == (8, 1)
    assert jnp.allclose(out, ref, atol=2e-3, rtol=2e-3)

    # 2) non-multiple-of-128 batch, multiple grid tiles (exercises padding,
    #    the >=2-step tile cap, and the parallel batch grid), f32 operands
    x2 = jax.random.normal(kx2, (300, input_size), jnp.float32)
    out2 = jax.block_until_ready(
        reward_forward(x2, *params, compute_dtype=jnp.float32))
    ref2 = _reference(x2, *params)
    assert out2.shape == (300, 1)
    assert jnp.allclose(out2, ref2, atol=2e-3, rtol=2e-3)

    # 3) default bf16 MXU operands (bandwidth path), f32 accumulate/elementwise
    out3 = jax.block_until_ready(reward_forward(x2, *params))
    assert out3.shape == (300, 1)
    assert jnp.allclose(out3, ref2, atol=5e-2, rtol=5e-2)

    print("KERNEL_OK")
</pallas_src>

<mosaic_0001>
module attributes {stable_mosaic.version = 11 : i64} {
  func.func @_reward_kernel(%arg0: i32, %arg1: memref<128x8xf32, #tpu.memory_space<vmem>>, %arg2: memref<32x8xf32, #tpu.memory_space<vmem>>, %arg3: memref<32x1xf32, #tpu.memory_space<vmem>>, %arg4: memref<32x32xf32, #tpu.memory_space<vmem>>, %arg5: memref<32x1xf32, #tpu.memory_space<vmem>>, %arg6: memref<32x1xf32, #tpu.memory_space<vmem>>, %arg7: memref<1x1xf32, #tpu.memory_space<vmem>>, %arg8: memref<1x128xf32, #tpu.memory_space<vmem>>) attributes {dimension_semantics = [#tpu.dimension_semantics<parallel>], iteration_bounds = array<i64: 1>, scalar_prefetch = 0 : i64, scratch_operands = 0 : i64, tpu.core_type = #tpu.core_type<tc>, window_params = [{transform_indices = @transform_0, window_bounds = array<i64: 128, 8>}, {pipeline_mode = #tpu.pipeline_mode<synchronous>, transform_indices = @transform_1, window_bounds = array<i64: 32, 8>}, {pipeline_mode = #tpu.pipeline_mode<synchronous>, transform_indices = @transform_2, window_bounds = array<i64: 32, 1>}, {pipeline_mode = #tpu.pipeline_mode<synchronous>, transform_indices = @transform_3, window_bounds = array<i64: 32, 32>}, {pipeline_mode = #tpu.pipeline_mode<synchronous>, transform_indices = @transform_4, window_bounds = array<i64: 32, 1>}, {pipeline_mode = #tpu.pipeline_mode<synchronous>, transform_indices = @transform_5, window_bounds = array<i64: 32, 1>}, {pipeline_mode = #tpu.pipeline_mode<synchronous>, transform_indices = @transform_6, window_bounds = array<i64: 1, 1>}, {transform_indices = @transform_7, window_bounds = array<i64: 1, 128>}]} {
    %c0 = arith.constant 0 : index
    %c0_0 = arith.constant 0 : index
    %0 = vector.load %arg1[%c0, %c0_0] : memref<128x8xf32, #tpu.memory_space<vmem>>, vector<128x8xf32>
    %c0_1 = arith.constant 0 : index
    %c0_2 = arith.constant 0 : index
    %1 = vector.load %arg2[%c0_1, %c0_2] : memref<32x8xf32, #tpu.memory_space<vmem>>, vector<32x8xf32>
    %cst = arith.constant dense<0.000000e+00> : vector<32x128xf32>
    %2 = tpu.matmul %1, %0, %cst {dimension_numbers = #tpu.dot_dimension_numbers<[1], [1], [0], [0], [0, 0, 1, 0], [], []>} : vector<32x8xf32>, vector<128x8xf32>, vector<32x128xf32> -> vector<32x128xf32>
    %c0_3 = arith.constant 0 : index
    %c0_4 = arith.constant 0 : index
    %3 = vector.load %arg3[%c0_3, %c0_4] : memref<32x1xf32, #tpu.memory_space<vmem>>, vector<32x1xf32>
    %4 = vector.broadcast %3 : vector<32x1xf32> to vector<32x128xf32>
    %5 = arith.addf %2, %4 : vector<32x128xf32>
    %cst_5 = arith.constant 0.000000e+00 : f32
    %6 = vector.broadcast %cst_5 : f32 to vector<32x128xf32>
    %7 = arith.maximumf %5, %6 : vector<32x128xf32>
    %c0_6 = arith.constant 0 : index
    %c0_7 = arith.constant 0 : index
    %8 = vector.load %arg4[%c0_6, %c0_7] : memref<32x32xf32, #tpu.memory_space<vmem>>, vector<32x32xf32>
    %cst_8 = arith.constant dense<0.000000e+00> : vector<32x128xf32>
    %9 = tpu.matmul %8, %7, %cst_8 {dimension_numbers = #tpu.dot_dimension_numbers<[1], [0], [0], [1], [0, 0, 1, 1], [], []>} : vector<32x32xf32>, vector<32x128xf32>, vector<32x128xf32> -> vector<32x128xf32>
    %c0_9 = arith.constant 0 : index
    %c0_10 = arith.constant 0 : index
    %10 = vector.load %arg5[%c0_9, %c0_10] : memref<32x1xf32, #tpu.memory_space<vmem>>, vector<32x1xf32>
    %11 = vector.broadcast %10 : vector<32x1xf32> to vector<32x128xf32>
    %12 = arith.addf %9, %11 : vector<32x128xf32>
    %cst_11 = arith.constant 0.000000e+00 : f32
    %13 = vector.broadcast %cst_11 : f32 to vector<32x128xf32>
    %14 = arith.maximumf %12, %13 : vector<32x128xf32>
    %c0_12 = arith.constant 0 : index
    %c0_13 = arith.constant 0 : index
    %15 = vector.load %arg6[%c0_12, %c0_13] : memref<32x1xf32, #tpu.memory_space<vmem>>, vector<32x1xf32>
    %16 = vector.broadcast %15 : vector<32x1xf32> to vector<32x128xf32>
    %17 = arith.mulf %14, %16 : vector<32x128xf32>
    %cst_14 = arith.constant dense<0.000000e+00> : vector<128xf32>
    %18 = vector.multi_reduction <add>, %17, %cst_14 [0] : vector<32x128xf32> to vector<128xf32>
    %19 = vector.shape_cast %18 : vector<128xf32> to vector<1x128xf32>
    %c0_15 = arith.constant 0 : index
    %c0_16 = arith.constant 0 : index
    %20 = vector.load %arg7[%c0_15, %c0_16] : memref<1x1xf32, #tpu.memory_space<vmem>>, vector<1x1xf32>
    %21 = vector.broadcast %20 : vector<1x1xf32> to vector<1x128xf32>
    %22 = arith.addf %19, %21 : vector<1x128xf32>
    %cst_17 = arith.constant 0.000000e+00 : f32
    %23 = vector.broadcast %cst_17 : f32 to vector<1x128xf32>
    %24 = arith.subf %23, %22 : vector<1x128xf32>
    %25 = math.exp %24 : vector<1x128xf32>
    %cst_18 = arith.constant 1.000000e+00 : f32
    %26 = vector.broadcast %cst_18 : f32 to vector<1x128xf32>
    %27 = arith.addf %26, %25 : vector<1x128xf32>
    %28 = tpu.reciprocal %27 {approx = true} : vector<1x128xf32> -> vector<1x128xf32>
    %c0_19 = arith.constant 0 : index
    %c0_20 = arith.constant 0 : index
    %29 = vector.load %arg8[%c0_19, %c0_20] : memref<1x128xf32, #tpu.memory_space<vmem>>, vector<1x128xf32>
    tpu.vector_store %arg8[%c0_19, %c0_20], %28 {strides = array<i32>} : memref<1x128xf32, #tpu.memory_space<vmem>>, vector<1x128xf32>,
    return
  }
  func.func @transform_0(%arg0: i32) -> (i32, i32) {
    %c0_i32 = arith.constant 0 : i32
    %c0_i32_0 = arith.constant 0 : i32
    return %arg0, %c0_i32 : i32, i32
  }
  func.func @transform_1(%arg0: i32) -> (i32, i32) {
    %c0_i32 = arith.constant 0 : i32
    %c0_i32_0 = arith.constant 0 : i32
    %c0_i32_1 = arith.constant 0 : i32
    return %c0_i32, %c0_i32_0 : i32, i32
  }
  func.func @transform_2(%arg0: i32) -> (i32, i32) {
    %c0_i32 = arith.constant 0 : i32
    %c0_i32_0 = arith.constant 0 : i32
    %c0_i32_1 = arith.constant 0 : i32
    return %c0_i32, %c0_i32_0 : i32, i32
  }
  func.func @transform_3(%arg0: i32) -> (i32, i32) {
    %c0_i32 = arith.constant 0 : i32
    %c0_i32_0 = arith.constant 0 : i32
    %c0_i32_1 = arith.constant 0 : i32
    return %c0_i32, %c0_i32_0 : i32, i32
  }
  func.func @transform_4(%arg0: i32) -> (i32, i32) {
    %c0_i32 = arith.constant 0 : i32
    %c0_i32_0 = arith.constant 0 : i32
    %c0_i32_1 = arith.constant 0 : i32
    return %c0_i32, %c0_i32_0 : i32, i32
  }
  func.func @transform_5(%arg0: i32) -> (i32, i32) {
    %c0_i32 = arith.constant 0 : i32
    %c0_i32_0 = arith.constant 0 : i32
    %c0_i32_1 = arith.constant 0 : i32
    return %c0_i32, %c0_i32_0 : i32, i32
  }
  func.func @transform_6(%arg0: i32) -> (i32, i32) {
    %c0_i32 = arith.constant 0 : i32
    %c0_i32_0 = arith.constant 0 : i32
    %c0_i32_1 = arith.constant 0 : i32
    return %c0_i32, %c0_i32_0 : i32, i32
  }
  func.func @transform_7(%arg0: i32) -> (i32, i32) {
    %c0_i32 = arith.constant 0 : i32
    %c0_i32_0 = arith.constant 0 : i32
    return %c0_i32, %arg0 : i32, i32
  }
}

</mosaic_0001>

<llo_original>
// kernel: reward_forward.1
$region0: #{reward_forward.1}
  #allocation0 [shape = 'u32[]', space=smem, size = 0x4, offset = 0x4, fixed_abs, tag = 'smem constant byte address 0x4 - core index']
  #allocation1 [shape = 'u32[144,128]{1,0:T(1,128)}', space=vmem, size = 0x12000, scoped, tag = 'internal scratch']
  #allocation2 [shape = 'f32[1,1]{1,0:T(1,128)S(1)}', space=vmem, size = 0x200, scoped, tag = 'scoped memory for reward_forward.1']
  %s0 = inlined_call_operand.vmem [shape: f32[128,8], index: 0, kind: input, shape index: {}]
  %s1 = inlined_call_operand.vmem [shape: f32[32,8], index: 1, kind: input, shape index: {}]
  %s2 = inlined_call_operand.vmem [shape: f32[32,1], index: 2, kind: input, shape index: {}]
  %s3 = inlined_call_operand.vmem [shape: f32[32,32], index: 3, kind: input, shape index: {}]
  %s4 = inlined_call_operand.vmem [shape: f32[32,1], index: 4, kind: input, shape index: {}]
  %s5 = inlined_call_operand.vmem [shape: f32[32,1], index: 5, kind: input, shape index: {}]
  %s6 = inlined_call_operand.<no memory space> [shape: f32[1,1], index: 6, kind: input, shape index: {}]
  %s7 = inlined_call_operand.vmem [shape: f32[1,128], index: 7, kind: output, shape index: {}]
  %s8 = sld [smem:[#allocation0]]
  $region38: #{reward_forward.1} parent=0
    _
  %s10 = ssub.s32 1, %s8
  %s11 = scalar_select 0, %s10, %s8
  %v12 = vstv %s6
  %13 = vst [vmem:[#allocation2] sm:$0x1] %v12
  // Predicated region
  $region2: #{reward_forward.1} parent=0 // pred_check
    _
  $region3: #{reward_forward.1} parent=0 // pred_check_branch
    %15 = sbr.rel (0) target = $region5
  $region4: #{reward_forward.1} parent=0 // pred_region
    _
  $region5: #{reward_forward.1} parent=0 // pred_fallthru
    _
  // Predicated region
  $region6: #{reward_forward.1} parent=0 // pred_check
    _
  $region7: #{reward_forward.1} parent=0 // pred_check_branch
    %17 = sbr.rel (0) target = $region9
  $region8: #{reward_forward.1} parent=0 // pred_region
    _
  $region9: #{reward_forward.1} parent=0 // pred_fallthru
    _
  // Predicated region
  $region10: #{reward_forward.1} parent=0 // pred_check
    _
  $region11: #{reward_forward.1} parent=0 // pred_check_branch
    %19 = sbr.rel (0) target = $region13
  $region12: #{reward_forward.1} parent=0 // pred_region
    _
  $region13: #{reward_forward.1} parent=0 // pred_fallthru
    _
  // Predicated region
  $region14: #{reward_forward.1} parent=0 // pred_check
    _
  $region15: #{reward_forward.1} parent=0 // pred_check_branch
    %21 = sbr.rel (0) target = $region17
  $region16: #{reward_forward.1} parent=0 // pred_region
    _
  $region17: #{reward_forward.1} parent=0 // pred_fallthru
    _
  // Predicated region
  $region18: #{reward_forward.1} parent=0 // pred_check
    _
  $region19: #{reward_forward.1} parent=0 // pred_check_branch
    %23 = sbr.rel (0) target = $region21
  $region20: #{reward_forward.1} parent=0 // pred_region
    _
  $region21: #{reward_forward.1} parent=0 // pred_fallthru
    _
  // Predicated region
  $region22: #{reward_forward.1} parent=0 // pred_check
    _
  $region23: #{reward_forward.1} parent=0 // pred_check_branch
    %25 = sbr.rel (0) target = $region25
  $region24: #{reward_forward.1} parent=0 // pred_region
    _
  $region25: #{reward_forward.1} parent=0 // pred_fallthru
    _
  // Predicated region
  $region26: #{reward_forward.1} parent=0 // pred_check
    _
  $region27: #{reward_forward.1} parent=0 // pred_check_branch
    %27 = sbr.rel (0) target = $region29
  $region28: #{reward_forward.1} parent=0 // pred_region
    _
  $region29: #{reward_forward.1} parent=0 // pred_fallthru
    _
  %v28 = vld [vmem:[%s0] sm:$0xff]
  %v29 = vld [vmem:[%s0 + $0x8] sm:$0xff]
  %v30 = vld [vmem:[%s0 + $0x10] sm:$0xff]
  %v31 = vld [vmem:[%s0 + $0x18] sm:$0xff]
  %v32 = vld [vmem:[%s0 + $0x20] sm:$0xff]
  %v33 = vld [vmem:[%s0 + $0x28] sm:$0xff]
  %v34 = vld [vmem:[%s0 + $0x30] sm:$0xff]
  %v35 = vld [vmem:[%s0 + $0x38] sm:$0xff]
  %v36 = vld [vmem:[%s0 + $0x40] sm:$0xff]
  %v37 = vld [vmem:[%s0 + $0x48] sm:$0xff]
  %v38 = vld [vmem:[%s0 + $0x50] sm:$0xff]
  %v39 = vld [vmem:[%s0 + $0x58] sm:$0xff]
  %v40 = vld [vmem:[%s0 + $0x60] sm:$0xff]
  %v41 = vld [vmem:[%s0 + $0x68] sm:$0xff]
  %v42 = vld [vmem:[%s0 + $0x70] sm:$0xff]
  %v43 = vld [vmem:[%s0 + $0x78] sm:$0xff]
  %v44 = vld [vmem:[%s1] sm:$0xff]
  %v45 = vld [vmem:[%s1 + $0x8] sm:$0xff]
  %v46 = vld [vmem:[%s1 + $0x10] sm:$0xff]
  %v47 = vld [vmem:[%s1 + $0x18] sm:$0xff]
  %v48 = vld [vmem:[%s2] sm:$0xff]
  %v49 = vld [vmem:[%s2 + $0x8] sm:$0xff]
  %v50 = vld [vmem:[%s2 + $0x10] sm:$0xff]
  %v51 = vld [vmem:[%s2 + $0x18] sm:$0xff]
  %53 = vset.pattern.permute.xlu0 0
  %54 = vperm.xlu0 %53, %v48
  %v55 = vpop.permute.xlu0 %54
  %58 = vset.pattern.permute.xlu0 0
  %59 = vperm.xlu0 %58, %v49
  %v60 = vpop.permute.xlu0 %59
  %63 = vset.pattern.permute.xlu0 0
  %64 = vperm.xlu0 %63, %v50
  %v65 = vpop.permute.xlu0 %64
  %68 = vset.pattern.permute.xlu0 0
  %69 = vperm.xlu0 %68, %v51
  %v70 = vpop.permute.xlu0 %69
  %vm72 = vcmask 64512
  %v74 = vsel %vm72, %v44, 0
  %v77 = vsel %vm72, %v45, 0
  %v80 = vsel %vm72, %v46, 0
  %v83 = vsel %vm72, %v47, 0
  %v86 = vsel %vm72, %v28, 0
  %v89 = vsel %vm72, %v29, 0
  %v92 = vsel %vm72, %v30, 0
  %v95 = vsel %vm72, %v31, 0
  %v98 = vsel %vm72, %v32, 0
  %v101 = vsel %vm72, %v33, 0
  %v104 = vsel %vm72, %v34, 0
  %v107 = vsel %vm72, %v35, 0
  %v110 = vsel %vm72, %v36, 0
  %v113 = vsel %vm72, %v37, 0
  %v116 = vsel %vm72, %v38, 0
  %v119 = vsel %vm72, %v39, 0
  %v122 = vsel %vm72, %v40, 0
  %v125 = vsel %vm72, %v41, 0
  %v128 = vsel %vm72, %v42, 0
  %v131 = vsel %vm72, %v43, 0
  %133 = vmatprep.subr.mxu0 0.0
  %134 = vmatpush1.xpose.msra.mxu0 %v86
  %135 = vmatprep.subr.mxu0 0.0
  %136 = vmatpush1.xpose.msra.mxu0 %v89
  %137 = vmatprep.subr.mxu0 0.0
  %138 = vmatpush1.xpose.msra.mxu0 %v92
  %139 = vmatprep.subr.mxu0 0.0
  %140 = vmatpush1.xpose.msra.mxu0 %v95
  %141 = vmatprep.subr.mxu0 0.0
  %142 = vmatpush1.xpose.msra.mxu0 %v98
  %143 = vmatprep.subr.mxu0 0.0
  %144 = vmatpush1.xpose.msra.mxu0 %v101
  %145 = vmatprep.subr.mxu0 0.0
  %146 = vmatpush1.xpose.msra.mxu0 %v104
  %147 = vmatprep.subr.mxu0 0.0
  %148 = vmatpush1.xpose.msra.mxu0 %v107
  %149 = vmatprep.subr.mxu0 0.0
  %150 = vmatpush1.xpose.msra.mxu0 %v110
  %151 = vmatprep.subr.mxu0 0.0
  %152 = vmatpush1.xpose.msra.mxu0 %v113
  %153 = vmatprep.subr.mxu0 0.0
  %154 = vmatpush1.xpose.msra.mxu0 %v116
  %155 = vmatprep.subr.mxu0 0.0
  %156 = vmatpush1.xpose.msra.mxu0 %v119
  %157 = vmatprep.subr.mxu0 0.0
  %158 = vmatpush1.xpose.msra.mxu0 %v122
  %159 = vmatprep.subr.mxu0 0.0
  %160 = vmatpush1.xpose.msra.mxu0 %v125
  %161 = vmatprep.subr.mxu0 0.0
  %162 = vmatpush1.xpose.msra.mxu0 %v128
  %163 = vmatprep.subr.mxu0 0.0
  %164 = vmatpush1.xpose.msra.mxu0 %v131
  %165 = vmatprep.subr.mxu0 0.0
  %166 = vmatpush1.xpose.msra.mxu0 0.0
  %167 = vmatprep.subr.mxu0 0.0
  %168 = vmatpush1.xpose.msra.mxu0 0.0
  %169 = vmatprep.subr.mxu0 0.0
  %170 = vmatpush1.xpose.msra.mxu0 0.0
  %171 = vmatprep.subr.mxu0 0.0
  %172 = vmatpush1.xpose.msra.mxu0 0.0
  %173 = vmatprep.subr.mxu0 0.0
  %174 = vmatpush1.xpose.msra.mxu0 0.0
  %175 = vmatprep.subr.mxu0 0.0
  %176 = vmatpush1.xpose.msra.mxu0 0.0
  %177 = vmatprep.subr.mxu0 0.0
  %178 = vmatpush1.xpose.msra.mxu0 0.0
  %179 = vmatprep.subr.mxu0 0.0
  %180 = vmatpush1.xpose.msra.mxu0 0.0
  %181 = vmatprep.subr.mxu0 0.0
  %182 = vmatpush1.xpose.msra.mxu0 0.0
  %183 = vmatprep.subr.mxu0 0.0
  %184 = vmatpush1.xpose.msra.mxu0 0.0
  %185 = vmatprep.subr.mxu0 0.0
  %186 = vmatpush1.xpose.msra.mxu0 0.0
  %187 = vmatprep.subr.mxu0 0.0
  %188 = vmatpush1.xpose.msra.mxu0 0.0
  %189 = vmatprep.subr.mxu0 0.0
  %190 = vmatpush1.xpose.msra.mxu0 0.0
  %191 = vmatprep.subr.mxu0 0.0
  %192 = vmatpush1.xpose.msra.mxu0 0.0
  %193 = vmatprep.subr.mxu0 0.0
  %194 = vmatpush1.xpose.msra.mxu0 0.0
  %195 = vmatprep.subr.mxu0 0.0
  %196 = vmatpush1.xpose.msra.mxu0 0.0
  %197 = vmatprep.mubr.f32.mxu0 0.0
  %198 = vmatmul.mubr.f32.gmra.mrb[0].mxu0 %v74
  %v199 = vpop.f32.mrb[0].mxu0
  %v200 = vadd.f32 %v55, %v199
  %v201 = vpop.f32.mrb[0].mxu0
  %202 = vmatprep.mubr.f32.mxu0 0.0
  %203 = vmatmul.mubr.f32.gmra.mrb[0].mxu0 %v77
  %v204 = vpop.f32.mrb[0].mxu0
  %v205 = vadd.f32 %v60, %v204
  %v206 = vpop.f32.mrb[0].mxu0
  %207 = vmatprep.mubr.f32.mxu0 0.0
  %208 = vmatmul.mubr.f32.gmra.mrb[0].mxu0 %v80
  %v209 = vpop.f32.mrb[0].mxu0
  %v210 = vadd.f32 %v65, %v209
  %v211 = vpop.f32.mrb[0].mxu0
  %212 = vmatprep.mubr.f32.mxu0 0.0
  %213 = vmatmul.mubr.f32.gmra.mrb[0].mxu0 %v83
  %v214 = vpop.f32.mrb[0].mxu0
  %v215 = vadd.f32 %v70, %v214
  %v216 = vpop.f32.mrb[0].mxu0
  %217 = vdwg.mxu0
  %v218 = vmax.f32 %v200, 0.0
  %v219 = vmax.f32 %v205, 0.0
  %v220 = vmax.f32 %v210, 0.0
  %v221 = vmax.f32 %v215, 0.0
  %v222 = vld [vmem:[%s3] sm:$0xff]
  %v223 = vld [vmem:[%s3 + $0x8] sm:$0xff]
  %v224 = vld [vmem:[%s3 + $0x10] sm:$0xff]
  %v225 = vld [vmem:[%s3 + $0x18] sm:$0xff]
  %v226 = vld [vmem:[%s4] sm:$0xff]
  %v227 = vld [vmem:[%s4 + $0x8] sm:$0xff]
  %v228 = vld [vmem:[%s4 + $0x10] sm:$0xff]
  %v229 = vld [vmem:[%s4 + $0x18] sm:$0xff]
  %231 = vset.pattern.permute.xlu0 0
  %232 = vperm.xlu0 %231, %v226
  %v233 = vpop.permute.xlu0 %232
  %236 = vset.pattern.permute.xlu0 0
  %237 = vperm.xlu0 %236, %v227
  %v238 = vpop.permute.xlu0 %237
  %241 = vset.pattern.permute.xlu0 0
  %242 = vperm.xlu0 %241, %v228
  %v243 = vpop.permute.xlu0 %242
  %246 = vset.pattern.permute.xlu0 0
  %247 = vperm.xlu0 %246, %v229
  %v248 = vpop.permute.xlu0 %247
  %vm250 = vcmask 261120
  %v252 = vsel %vm250, %v222, 0
  %v255 = vsel %vm250, %v223, 0
  %v258 = vsel %vm250, %v224, 0
  %v261 = vsel %vm250, %v225, 0
  %263 = vmatprep.subr.mxu0 0.0
  %264 = vmatpush1.msra.mxu0 %v218
  %265 = vmatprep.subr.mxu0 0.0
  %266 = vmatpush1.msra.mxu0 %v219
  %267 = vmatprep.subr.mxu0 0.0
  %268 = vmatpush1.msra.mxu0 %v220
  %269 = vmatprep.subr.mxu0 0.0
  %270 = vmatpush1.msra.mxu0 %v221
  %271 = vmatprep.subr.mxu0 0.0
  %272 = vmatpush1.msra.mxu0 0.0
  %273 = vmatprep.subr.mxu0 0.0
  %274 = vmatpush1.msra.mxu0 0.0
  %275 = vmatprep.subr.mxu0 0.0
  %276 = vmatpush1.msra.mxu0 0.0
  %277 = vmatprep.subr.mxu0 0.0
  %278 = vmatpush1.msra.mxu0 0.0
  %279 = vmatprep.subr.mxu0 0.0
  %280 = vmatpush1.msra.mxu0 0.0
  %281 = vmatprep.subr.mxu0 0.0
  %282 = vmatpush1.msra.mxu0 0.0
  %283 = vmatprep.subr.mxu0 0.0
  %284 = vmatpush1.msra.mxu0 0.0
  %285 = vmatprep.subr.mxu0 0.0
  %286 = vmatpush1.msra.mxu0 0.0
  %287 = vmatprep.subr.mxu0 0.0
  %288 = vmatpush1.msra.mxu0 0.0
  %289 = vmatprep.subr.mxu0 0.0
  %290 = vmatpush1.msra.mxu0 0.0
  %291 = vmatprep.subr.mxu0 0.0
  %292 = vmatpush1.msra.mxu0 0.0
  %293 = vmatprep.subr.mxu0 0.0
  %294 = vmatpush1.msra.mxu0 0.0
  %295 = vmatprep.subr.mxu0 0.0
  %296 = vmatpush1.msra.mxu0 0.0
  %297 = vmatprep.subr.mxu0 0.0
  %298 = vmatpush1.msra.mxu0 0.0
  %299 = vmatprep.subr.mxu0 0.0
  %300 = vmatpush1.msra.mxu0 0.0
  %301 = vmatprep.subr.mxu0 0.0
  %302 = vmatpush1.msra.mxu0 0.0
  %303 = vmatprep.subr.mxu0 0.0
  %304 = vmatpush1.msra.mxu0 0.0
  %305 = vmatprep.subr.mxu0 0.0
  %306 = vmatpush1.msra.mxu0 0.0
  %307 = vmatprep.subr.mxu0 0.0
  %308 = vmatpush1.msra.mxu0 0.0
  %309 = vmatprep.subr.mxu0 0.0
  %310 = vmatpush1.msra.mxu0 0.0
  %311 = vmatprep.subr.mxu0 0.0
  %312 = vmatpush1.msra.mxu0 0.0
  %313 = vmatprep.subr.mxu0 0.0
  %314 = vmatpush1.msra.mxu0 0.0
  %315 = vmatprep.subr.mxu0 0.0
  %316 = vmatpush1.msra.mxu0 0.0
  %317 = vmatprep.subr.mxu0 0.0
  %318 = vmatpush1.msra.mxu0 0.0
  %319 = vmatprep.subr.mxu0 0.0
  %320 = vmatpush1.msra.mxu0 0.0
  %321 = vmatprep.subr.mxu0 0.0
  %322 = vmatpush1.msra.mxu0 0.0
  %323 = vmatprep.subr.mxu0 0.0
  %324 = vmatpush1.msra.mxu0 0.0
  %325 = vmatprep.subr.mxu0 0.0
  %326 = vmatpush1.msra.mxu0 0.0
  %327 = vmatprep.mubr.f32.mxu0 0.0
  %328 = vmatmul.mubr.f32.gmra.mrb[0].mxu0 %v252
  %v329 = vpop.f32.mrb[0].mxu0
  %v330 = vadd.f32 %v233, %v329
  %v331 = vpop.f32.mrb[0].mxu0
  %332 = vmatprep.mubr.f32.mxu0 0.0
  %333 = vmatmul.mubr.f32.gmra.mrb[0].mxu0 %v255
  %v334 = vpop.f32.mrb[0].mxu0
  %v335 = vadd.f32 %v238, %v334
  %v336 = vpop.f32.mrb[0].mxu0
  %337 = vmatprep.mubr.f32.mxu0 0.0
  %338 = vmatmul.mubr.f32.gmra.mrb[0].mxu0 %v258
  %v339 = vpop.f32.mrb[0].mxu0
  %v340 = vadd.f32 %v243, %v339
  %v341 = vpop.f32.mrb[0].mxu0
  %342 = vmatprep.mubr.f32.mxu0 0.0
  %343 = vmatmul.mubr.f32.gmra.mrb[0].mxu0 %v261
  %v344 = vpop.f32.mrb[0].mxu0
  %v345 = vadd.f32 %v248, %v344
  %v346 = vpop.f32.mrb[0].mxu0
  %347 = vdwg.mxu0
  %v348 = vmax.f32 %v330, 0.0
  %v349 = vmax.f32 %v335, 0.0
  %v350 = vmax.f32 %v340, 0.0
  %v351 = vmax.f32 %v345, 0.0
  %v352 = vld [vmem:[%s5] sm:$0xff]
  %v353 = vld [vmem:[%s5 + $0x8] sm:$0xff]
  %v354 = vld [vmem:[%s5 + $0x10] sm:$0xff]
  %v355 = vld [vmem:[%s5 + $0x18] sm:$0xff]
  %357 = vset.pattern.permute.xlu0 0
  %358 = vperm.xlu0 %357, %v352
  %v359 = vpop.permute.xlu0 %358
  %362 = vset.pattern.permute.xlu0 0
  %363 = vperm.xlu0 %362, %v353
  %v364 = vpop.permute.xlu0 %363
  %367 = vset.pattern.permute.xlu0 0
  %368 = vperm.xlu0 %367, %v354
  %v369 = vpop.permute.xlu0 %368
  %372 = vset.pattern.permute.xlu0 0
  %373 = vperm.xlu0 %372, %v355
  %v374 = vpop.permute.xlu0 %373
  %v376 = vmul.f32 %v348, %v359
  %v377 = vmul.f32 %v349, %v364
  %v378 = vmul.f32 %v350, %v369
  %v379 = vmul.f32 %v351, %v374
  %v380 = vadd.f32 %v376, %v377
  %v381 = vadd.f32 %v380, %v378
  %v382 = vadd.f32 %v381, %v379
  %v383 = vrot.slane %v382, 4
  %v384 = vadd.f32 %v382, %v383
  %v385 = vrot.slane %v384, 2
  %v386 = vadd.f32 %v384, %v385
  %v387 = vrot.slane %v386, 1
  %v388 = vadd.f32 %v386, %v387
  %v389 = vld [vmem:[#allocation2] sm:$0x1]
  %391 = vset.pattern.permute.xlu0 0
  %392 = vperm.xlu0 %391, %v389
  %v393 = vpop.permute.xlu0 %392
  %v395 = vlaneseq
  %v396 = vshrl.u32 %v395, 7
  %v397 = vsub.s32 0, %v396
  %v398 = vrot.slane %v393, %v397
  %v399 = vadd.f32 %v388, %v398
  %v400 = vsub.f32 0.0, %v399
  %v401 = vmul.f32 %v400, 1.442695
  %v402 = vpow.pop %v401
  %v403 = vadd.f32 %v402, 1.0
  %v404 = vrcp.pop %v403
  %405 = vst [vmem:[%s7] sm:$0x1] %v404
  // Predicated region
  $region30: #{reward_forward.1} parent=0 // pred_check
    _
  $region31: #{reward_forward.1} parent=0 // pred_check_branch
    %407 = sbr.rel (0) target = $region33
  $region32: #{reward_forward.1} parent=0 // pred_region
    _
  $region33: #{reward_forward.1} parent=0 // pred_fallthru
    _
  // Predicated region
  $region34: #{reward_forward.1} parent=0 // pred_check
    _
  $region35: #{reward_forward.1} parent=0 // pred_check_branch
    %409 = sbr.rel (0) target = $region37
  $region36: #{reward_forward.1} parent=0 // pred_region
    _
  $region37: #{reward_forward.1} parent=0 // pred_fallthru
    _

</llo_original>
